<compile_context>
chip_gen: v6e
topology: v6e:2x2x1
jax: 0.10.0
libtpu: 0.0.40
codegen_flags: <defaults>
</compile_context>

<pallas_src>
import functools

import jax
import jax.numpy as jnp
from jax import lax
from jax.experimental import pallas as pl
from jax.experimental.pallas import tpu as pltpu


def _round_up(n, m):
    return ((n + m - 1) // m) * m


def _adaptive_distill_kernel(x_ref, w1_ref, b1_ref, w2_ref, b2_ref,
                             wh_ref, bh_ref, out_ref, *, chunk):
    # x_ref: [TB, D] batch-major bf16 (batch on sublanes, features on lanes)
    # out_ref: [4, TB] lane-dense f32 (row 0 = sigmoid, rows 1:4 = softmax)
    w1 = w1_ref[...]          # [32, D]  bf16 (VMEM-resident across grid steps)
    b1 = b1_ref[...]          # [32, 1]  f32
    w2 = w2_ref[...]          # [16, 32] f32
    b2 = b2_ref[...]          # [16, 1]  f32
    wh = wh_ref[...]          # [4, 16]  f32 (row 0 student, rows 1:4 attention)
    bh = bh_ref[...]          # [4, 1]   f32

    n_chunks = x_ref.shape[0] // chunk

    def body(c, carry):
        off = pl.multiple_of(c * chunk, chunk)
        xc = x_ref[pl.ds(off, chunk), :]                          # [chunk, D] bf16

        # h1 = W1 @ xc^T : contract the lane (feature) axis of both -> [32, chunk]
        h1 = lax.dot_general(w1, xc, (((1,), (1,)), ((), ())),
                             preferred_element_type=jnp.float32) + b1
        h1 = jnp.maximum(h1, 0.0)                                 # [32, chunk]

        h2 = jnp.dot(w2, h1, preferred_element_type=jnp.float32) + b2
        f = jnp.maximum(h2, 0.0)                                  # [16, chunk]

        # fused heads: [4,16] @ [16,chunk] -> [4,chunk]
        z = jnp.dot(wh, f, preferred_element_type=jnp.float32) + bh

        # student head: sigmoid via tanh (EUP, overflow-safe)
        stud = 0.5 * (jnp.tanh(0.5 * z[0:1, :]) + 1.0)            # [1, chunk]

        # attention head: 3-way softmax with explicit row ops (no XLU axis-0
        # reduce) and an exact divide so rows sum to 1.
        m = jnp.maximum(z[1:2, :], jnp.maximum(z[2:3, :], z[3:4, :]))
        e = jnp.exp(z[1:4, :] - m)                                # [3, chunk]
        inv = 1.0 / (e[0:1, :] + e[1:2, :] + e[2:3, :])

        # direct lane-dense row stores (no concatenate)
        out_ref[0:1, pl.ds(off, chunk)] = stud
        out_ref[1:4, pl.ds(off, chunk)] = e * inv
        return carry

    lax.fori_loop(0, n_chunks, body, 0, unroll=True)


def adaptive_distill_forward(x, params, tile_b=8192, chunk_b=512,
                             stream_dtype=jnp.bfloat16):
    """x: [B, input_dim] float32.  params: dict (see init_params)."""
    B, D = x.shape

    # --- batch tiling -------------------------------------------------------
    tb = min(tile_b, _round_up(B, 128))
    # v7x megacore: force >=2 grid steps when there is enough batch to split.
    if B > 128 and _round_up(B, tb) // tb < 2:
        tb = _round_up(max(128, (tb + 1) // 2), 128)
    chunk = min(chunk_b, tb)
    tb = _round_up(tb, chunk)            # whole number of in-kernel chunks
    b_pad = _round_up(B, tb)
    grid = (b_pad // tb,)

    # --- inputs (no transpose; pad only when needed; bf16 stream) -----------
    xs = x.astype(stream_dtype)
    if b_pad != B:
        xs = jnp.pad(xs, ((0, b_pad - B), (0, 0)))

    w1 = params["w1"].astype(stream_dtype)                       # [32, D]
    b1 = params["b1"]                                            # [32, 1]
    w2, b2 = params["w2"], params["b2"]                          # [16,32], [16,1]
    # fuse heads: [4,16] weight / [4,1] bias (row 0 student, rows 1:4 attention)
    wh = jnp.concatenate([params["ws"], params["wa"]], axis=0)
    bh = jnp.concatenate([params["bs"], params["ba"]], axis=0)

    const_spec = lambda shape: pl.BlockSpec(shape, lambda i: (0, 0))

    flops = 2 * b_pad * (D * 32 + 32 * 16 + 16 * 4)
    bytes_accessed = (b_pad * D * xs.dtype.itemsize + 4 * b_pad * 4 +
                      w1.size * 2 + 4 * (b1.size + w2.size + b2.size +
                                         wh.size + bh.size))
    cost = pl.CostEstimate(flops=flops, transcendentals=4 * b_pad,
                           bytes_accessed=bytes_accessed)

    # explicit VMEM budget (v5e scoped default 16 MiB, v7x physical 64 MiB)
    vmem_est = 2 * tb * D * xs.dtype.itemsize + 2 * 4 * tb * 4 + (2 << 20)
    vmem_limit = min(max(vmem_est, 32 << 20), 48 << 20)

    packed = pl.pallas_call(
        functools.partial(_adaptive_distill_kernel, chunk=chunk),
        out_shape=jax.ShapeDtypeStruct((4, b_pad), jnp.float32),
        grid=grid,
        in_specs=[
            pl.BlockSpec((tb, D), lambda i: (i, 0)),             # x tile, batch-major
            const_spec(w1.shape), const_spec(b1.shape),          # resident weights
            const_spec(w2.shape), const_spec(b2.shape),
            const_spec(wh.shape), const_spec(bh.shape),
        ],
        out_specs=pl.BlockSpec((4, tb), lambda i: (0, i)),       # packed lane-dense out
        compiler_params=pltpu.CompilerParams(
            dimension_semantics=("parallel",),
            vmem_limit_bytes=int(vmem_limit)),
        cost_estimate=cost,
    )(xs, w1, b1, w2, b2, wh, bh)

    student = packed[0:1, :B].T                                  # [B, 1]
    attention = packed[1:4, :B].T                                # [B, 3]
    return student, attention


def init_params(key, input_dim):
    """Deterministic synthetic init (uniform, PyTorch-Linear fan-in scaling).

    Weights are stored feature-major: W is [out_features, in_features], b is
    [out_features, 1], matching the kernel's W @ x orientation.
    """
    ks = jax.random.split(key, 8)

    def lin(kw, kb, fan_in, fan_out):
        bound = 1.0 / jnp.sqrt(float(fan_in))
        w = jax.random.uniform(kw, (fan_out, fan_in), jnp.float32, -bound, bound)
        b = jax.random.uniform(kb, (fan_out, 1), jnp.float32, -bound, bound)
        return w, b

    w1, b1 = lin(ks[0], ks[1], input_dim, 32)
    w2, b2 = lin(ks[2], ks[3], 32, 16)
    ws, bs = lin(ks[4], ks[5], 16, 1)
    wa, ba = lin(ks[6], ks[7], 16, 3)
    return {"w1": w1, "b1": b1, "w2": w2, "b2": b2,
            "ws": ws, "bs": bs, "wa": wa, "ba": ba}


def _reference_forward(x, p):
    """Pure-JAX f32 reference (batch-major math, same params)."""
    f = jnp.maximum(x @ p["w1"].T + p["b1"].T, 0.0)
    f = jnp.maximum(f @ p["w2"].T + p["b2"].T, 0.0)
    s = jax.nn.sigmoid(f @ p["ws"].T + p["bs"].T)
    a = jax.nn.softmax(f @ p["wa"].T + p["ba"].T, axis=1)
    return s, a


if __name__ == "__main__":
    key = jax.random.PRNGKey(0)
    k_x, k_p = jax.random.split(key)

    batch = 8
    input_dim = 20
    x = jax.random.normal(k_x, (batch, input_dim), jnp.float32)
    params = init_params(k_p, input_dim)

    student, attention = adaptive_distill_forward(x, params)
    student = jax.block_until_ready(student)
    attention = jax.block_until_ready(attention)

    # correctness check against pure-JAX f32 reference (bf16-stream tolerance)
    s_ref, a_ref = _reference_forward(x, params)
    assert student.shape == (batch, 1) and attention.shape == (batch, 3)
    assert jnp.allclose(student, s_ref, atol=5e-3, rtol=5e-3)
    assert jnp.allclose(attention, a_ref, atol=5e-3, rtol=5e-3)
    # exact divide in-kernel -> softmax rows sum to 1 to f32 precision
    assert jnp.allclose(jnp.sum(attention, axis=1), 1.0, atol=1e-3)

    print("KERNEL_OK")
</pallas_src>

<mosaic_0001>
module attributes {stable_mosaic.version = 11 : i64} {
  func.func @_adaptive_distill_kernel(%arg0: i32, %arg1: memref<128x20xbf16, #tpu.memory_space<vmem>>, %arg2: memref<32x20xbf16, #tpu.memory_space<vmem>>, %arg3: memref<32x1xf32, #tpu.memory_space<vmem>>, %arg4: memref<16x32xf32, #tpu.memory_space<vmem>>, %arg5: memref<16x1xf32, #tpu.memory_space<vmem>>, %arg6: memref<4x16xf32, #tpu.memory_space<vmem>>, %arg7: memref<4x1xf32, #tpu.memory_space<vmem>>, %arg8: memref<4x128xf32, #tpu.memory_space<vmem>>) attributes {dimension_semantics = [#tpu.dimension_semantics<parallel>], iteration_bounds = array<i64: 1>, scalar_prefetch = 0 : i64, scratch_operands = 0 : i64, tpu.core_type = #tpu.core_type<tc>, window_params = [{transform_indices = @transform_0, window_bounds = array<i64: 128, 20>}, {pipeline_mode = #tpu.pipeline_mode<synchronous>, transform_indices = @transform_1, window_bounds = array<i64: 32, 20>}, {pipeline_mode = #tpu.pipeline_mode<synchronous>, transform_indices = @transform_2, window_bounds = array<i64: 32, 1>}, {pipeline_mode = #tpu.pipeline_mode<synchronous>, transform_indices = @transform_3, window_bounds = array<i64: 16, 32>}, {pipeline_mode = #tpu.pipeline_mode<synchronous>, transform_indices = @transform_4, window_bounds = array<i64: 16, 1>}, {pipeline_mode = #tpu.pipeline_mode<synchronous>, transform_indices = @transform_5, window_bounds = array<i64: 4, 16>}, {pipeline_mode = #tpu.pipeline_mode<synchronous>, transform_indices = @transform_6, window_bounds = array<i64: 4, 1>}, {transform_indices = @transform_7, window_bounds = array<i64: 4, 128>}]} {
    %c0 = arith.constant 0 : index
    %c0_0 = arith.constant 0 : index
    %0 = vector.load %arg2[%c0, %c0_0] : memref<32x20xbf16, #tpu.memory_space<vmem>>, vector<32x20xbf16>
    %c0_1 = arith.constant 0 : index
    %c0_2 = arith.constant 0 : index
    %1 = vector.load %arg3[%c0_1, %c0_2] : memref<32x1xf32, #tpu.memory_space<vmem>>, vector<32x1xf32>
    %c0_3 = arith.constant 0 : index
    %c0_4 = arith.constant 0 : index
    %2 = vector.load %arg4[%c0_3, %c0_4] : memref<16x32xf32, #tpu.memory_space<vmem>>, vector<16x32xf32>
    %c0_5 = arith.constant 0 : index
    %c0_6 = arith.constant 0 : index
    %3 = vector.load %arg5[%c0_5, %c0_6] : memref<16x1xf32, #tpu.memory_space<vmem>>, vector<16x1xf32>
    %c0_7 = arith.constant 0 : index
    %c0_8 = arith.constant 0 : index
    %4 = vector.load %arg6[%c0_7, %c0_8] : memref<4x16xf32, #tpu.memory_space<vmem>>, vector<4x16xf32>
    %c0_9 = arith.constant 0 : index
    %c0_10 = arith.constant 0 : index
    %5 = vector.load %arg7[%c0_9, %c0_10] : memref<4x1xf32, #tpu.memory_space<vmem>>, vector<4x1xf32>
    %c0_i32 = arith.constant 0 : i32
    %c128_i32 = arith.constant 128 : i32
    %6 = arith.muli %c0_i32, %c128_i32 : i32
    %7 = tpu.assume_multiple %6, 128 : i32
    %8 = arith.index_cast %7 : i32 to index
    %c0_11 = arith.constant 0 : index
    %9 = vector.load %arg1[%8, %c0_11] : memref<128x20xbf16, #tpu.memory_space<vmem>>, vector<128x20xbf16>
    %cst = arith.constant dense<0.000000e+00> : vector<32x128xf32>
    %10 = tpu.matmul %0, %9, %cst {dimension_numbers = #tpu.dot_dimension_numbers<[1], [1], [0], [0], [0, 0, 1, 0], [], []>} : vector<32x20xbf16>, vector<128x20xbf16>, vector<32x128xf32> -> vector<32x128xf32>
    %11 = vector.broadcast %1 : vector<32x1xf32> to vector<32x128xf32>
    %12 = arith.addf %10, %11 : vector<32x128xf32>
    %cst_12 = arith.constant 0.000000e+00 : f32
    %13 = vector.broadcast %cst_12 : f32 to vector<32x128xf32>
    %14 = arith.maximumf %12, %13 : vector<32x128xf32>
    %cst_13 = arith.constant dense<0.000000e+00> : vector<16x128xf32>
    %15 = tpu.matmul %2, %14, %cst_13 {dimension_numbers = #tpu.dot_dimension_numbers<[1], [0], [0], [1], [0, 0, 1, 1], [], []>} : vector<16x32xf32>, vector<32x128xf32>, vector<16x128xf32> -> vector<16x128xf32>
    %16 = vector.broadcast %3 : vector<16x1xf32> to vector<16x128xf32>
    %17 = arith.addf %15, %16 : vector<16x128xf32>
    %cst_14 = arith.constant 0.000000e+00 : f32
    %18 = vector.broadcast %cst_14 : f32 to vector<16x128xf32>
    %19 = arith.maximumf %17, %18 : vector<16x128xf32>
    %cst_15 = arith.constant dense<0.000000e+00> : vector<4x128xf32>
    %20 = tpu.matmul %4, %19, %cst_15 {dimension_numbers = #tpu.dot_dimension_numbers<[1], [0], [0], [1], [0, 0, 1, 1], [], []>} : vector<4x16xf32>, vector<16x128xf32>, vector<4x128xf32> -> vector<4x128xf32>
    %21 = vector.broadcast %5 : vector<4x1xf32> to vector<4x128xf32>
    %22 = arith.addf %20, %21 : vector<4x128xf32>
    %23 = vector.extract_strided_slice %22 {offsets = [0, 0], sizes = [1, 128], strides = [1, 1]} : vector<4x128xf32> to vector<1x128xf32>
    %cst_16 = arith.constant 5.000000e-01 : f32
    %24 = vector.broadcast %cst_16 : f32 to vector<1x128xf32>
    %25 = arith.mulf %24, %23 : vector<1x128xf32>
    %26 = math.tanh %25 : vector<1x128xf32>
    %cst_17 = arith.constant 1.000000e+00 : f32
    %27 = vector.broadcast %cst_17 : f32 to vector<1x128xf32>
    %28 = arith.addf %26, %27 : vector<1x128xf32>
    %cst_18 = arith.constant 5.000000e-01 : f32
    %29 = vector.broadcast %cst_18 : f32 to vector<1x128xf32>
    %30 = arith.mulf %29, %28 : vector<1x128xf32>
    %31 = vector.extract_strided_slice %22 {offsets = [1, 0], sizes = [1, 128], strides = [1, 1]} : vector<4x128xf32> to vector<1x128xf32>
    %32 = vector.extract_strided_slice %22 {offsets = [2, 0], sizes = [1, 128], strides = [1, 1]} : vector<4x128xf32> to vector<1x128xf32>
    %33 = vector.extract_strided_slice %22 {offsets = [3, 0], sizes = [1, 128], strides = [1, 1]} : vector<4x128xf32> to vector<1x128xf32>
    %34 = arith.maximumf %32, %33 : vector<1x128xf32>
    %35 = arith.maximumf %31, %34 : vector<1x128xf32>
    %36 = vector.extract_strided_slice %22 {offsets = [1, 0], sizes = [3, 128], strides = [1, 1]} : vector<4x128xf32> to vector<3x128xf32>
    %37 = vector.broadcast %35 : vector<1x128xf32> to vector<3x128xf32>
    %38 = arith.subf %36, %37 : vector<3x128xf32>
    %39 = math.exp %38 : vector<3x128xf32>
    %40 = vector.extract_strided_slice %39 {offsets = [0, 0], sizes = [1, 128], strides = [1, 1]} : vector<3x128xf32> to vector<1x128xf32>
    %41 = vector.extract_strided_slice %39 {offsets = [1, 0], sizes = [1, 128], strides = [1, 1]} : vector<3x128xf32> to vector<1x128xf32>
    %42 = arith.addf %40, %41 : vector<1x128xf32>
    %43 = vector.extract_strided_slice %39 {offsets = [2, 0], sizes = [1, 128], strides = [1, 1]} : vector<3x128xf32> to vector<1x128xf32>
    %44 = arith.addf %42, %43 : vector<1x128xf32>
    %cst_19 = arith.constant 1.000000e+00 : f32
    %45 = vector.broadcast %cst_19 : f32 to vector<1x128xf32>
    %46 = arith.divf %45, %44 : vector<1x128xf32>
    %c0_20 = arith.constant 0 : index
    %47 = arith.index_cast %7 : i32 to index
    %48 = vector.load %arg8[%c0_20, %47] : memref<4x128xf32, #tpu.memory_space<vmem>>, vector<1x128xf32>
    tpu.vector_store %arg8[%c0_20, %47], %30 {strides = array<i32>} : memref<4x128xf32, #tpu.memory_space<vmem>>, vector<1x128xf32>,
    %49 = vector.broadcast %46 : vector<1x128xf32> to vector<3x128xf32>
    %50 = arith.mulf %39, %49 : vector<3x128xf32>
    %c1 = arith.constant 1 : index
    %51 = arith.index_cast %7 : i32 to index
    %52 = vector.load %arg8[%c1, %51] : memref<4x128xf32, #tpu.memory_space<vmem>>, vector<3x128xf32>
    tpu.vector_store %arg8[%c1, %51], %50 {strides = array<i32>} : memref<4x128xf32, #tpu.memory_space<vmem>>, vector<3x128xf32>,
    %c1_i32 = arith.constant 1 : i32
    return
  }
  func.func @transform_0(%arg0: i32) -> (i32, i32) {
    %c0_i32 = arith.constant 0 : i32
    %c0_i32_0 = arith.constant 0 : i32
    return %arg0, %c0_i32 : i32, i32
  }
  func.func @transform_1(%arg0: i32) -> (i32, i32) {
    %c0_i32 = arith.constant 0 : i32
    %c0_i32_0 = arith.constant 0 : i32
    %c0_i32_1 = arith.constant 0 : i32
    return %c0_i32, %c0_i32_0 : i32, i32
  }
  func.func @transform_2(%arg0: i32) -> (i32, i32) {
    %c0_i32 = arith.constant 0 : i32
    %c0_i32_0 = arith.constant 0 : i32
    %c0_i32_1 = arith.constant 0 : i32
    return %c0_i32, %c0_i32_0 : i32, i32
  }
  func.func @transform_3(%arg0: i32) -> (i32, i32) {
    %c0_i32 = arith.constant 0 : i32
    %c0_i32_0 = arith.constant 0 : i32
    %c0_i32_1 = arith.constant 0 : i32
    return %c0_i32, %c0_i32_0 : i32, i32
  }
  func.func @transform_4(%arg0: i32) -> (i32, i32) {
    %c0_i32 = arith.constant 0 : i32
    %c0_i32_0 = arith.constant 0 : i32
    %c0_i32_1 = arith.constant 0 : i32
    return %c0_i32, %c0_i32_0 : i32, i32
  }
  func.func @transform_5(%arg0: i32) -> (i32, i32) {
    %c0_i32 = arith.constant 0 : i32
    %c0_i32_0 = arith.constant 0 : i32
    %c0_i32_1 = arith.constant 0 : i32
    return %c0_i32, %c0_i32_0 : i32, i32
  }
  func.func @transform_6(%arg0: i32) -> (i32, i32) {
    %c0_i32 = arith.constant 0 : i32
    %c0_i32_0 = arith.constant 0 : i32
    %c0_i32_1 = arith.constant 0 : i32
    return %c0_i32, %c0_i32_0 : i32, i32
  }
  func.func @transform_7(%arg0: i32) -> (i32, i32) {
    %c0_i32 = arith.constant 0 : i32
    %c0_i32_0 = arith.constant 0 : i32
    return %c0_i32, %arg0 : i32, i32
  }
}

</mosaic_0001>

<llo_original>
// kernel: tpu_custom_call.1
$region0: #{tpu_custom_call.1}
  #allocation0 [shape = 'u32[]', space=smem, size = 0x4, offset = 0x4, fixed_abs, tag = 'smem constant byte address 0x4 - core index']
  #allocation1 [shape = 'u32[144,128]{1,0:T(1,128)}', space=vmem, size = 0x12000, scoped, tag = 'internal scratch']
  %s0 = inlined_call_operand.vmem [shape: bf16[128,20], index: 0, kind: input, shape index: {}]
  %s1 = inlined_call_operand.vmem [shape: bf16[32,20], index: 1, kind: input, shape index: {}]
  %s2 = inlined_call_operand.vmem [shape: f32[32,1], index: 2, kind: input, shape index: {}]
  %s3 = inlined_call_operand.vmem [shape: f32[16,32], index: 3, kind: input, shape index: {}]
  %s4 = inlined_call_operand.vmem [shape: f32[16,1], index: 4, kind: input, shape index: {}]
  %s5 = inlined_call_operand.vmem [shape: f32[4,16], index: 5, kind: input, shape index: {}]
  %s6 = inlined_call_operand.vmem [shape: f32[4,1], index: 6, kind: input, shape index: {}]
  %s7 = inlined_call_operand.hbm [shape: f32[4,128], index: 7, kind: output, shape index: {}]
  %s8 = sld [smem:[#allocation0]]
  $region38: #{tpu_custom_call.1} parent=0
    _
  %s10 = ssub.s32 1, %s8
  %s11 = scalar_select 0, %s10, %s8
  $region1: #{tpu_custom_call.1} parent=0
    #allocation2 [shape = 'u8[2048]{0}', space=vmem, size = 0x800, scoped, tag = 'output window, operand 0, single buffered']
    #allocation3 [shape = 's32[1]{0}', space=sflag, size = 0x4, scoped, tag = 'scoped memory for tpu_custom_call.1']
    %12 = vsyncpa [#allocation3], 0
    // Predicated region
    $region2: #{tpu_custom_call.1} parent=1 // pred_check
      _
    $region3: #{tpu_custom_call.1} parent=1 // pred_check_branch
      %14 = sbr.rel (0) target = $region5
    $region4: #{tpu_custom_call.1} parent=1 // pred_region
      _
    $region5: #{tpu_custom_call.1} parent=1 // pred_fallthru
      _
    // Predicated region
    $region6: #{tpu_custom_call.1} parent=1 // pred_check
      _
    $region7: #{tpu_custom_call.1} parent=1 // pred_check_branch
      %16 = sbr.rel (0) target = $region9
    $region8: #{tpu_custom_call.1} parent=1 // pred_region
      _
    $region9: #{tpu_custom_call.1} parent=1 // pred_fallthru
      _
    // Predicated region
    $region10: #{tpu_custom_call.1} parent=1 // pred_check
      _
    $region11: #{tpu_custom_call.1} parent=1 // pred_check_branch
      %18 = sbr.rel (0) target = $region13
    $region12: #{tpu_custom_call.1} parent=1 // pred_region
      _
    $region13: #{tpu_custom_call.1} parent=1 // pred_fallthru
      _
    // Predicated region
    $region14: #{tpu_custom_call.1} parent=1 // pred_check
      _
    $region15: #{tpu_custom_call.1} parent=1 // pred_check_branch
      %20 = sbr.rel (0) target = $region17
    $region16: #{tpu_custom_call.1} parent=1 // pred_region
      _
    $region17: #{tpu_custom_call.1} parent=1 // pred_fallthru
      _
    // Predicated region
    $region18: #{tpu_custom_call.1} parent=1 // pred_check
      _
    $region19: #{tpu_custom_call.1} parent=1 // pred_check_branch
      %22 = sbr.rel (0) target = $region21
    $region20: #{tpu_custom_call.1} parent=1 // pred_region
      _
    $region21: #{tpu_custom_call.1} parent=1 // pred_fallthru
      _
    // Predicated region
    $region22: #{tpu_custom_call.1} parent=1 // pred_check
      _
    $region23: #{tpu_custom_call.1} parent=1 // pred_check_branch
      %24 = sbr.rel (0) target = $region25
    $region24: #{tpu_custom_call.1} parent=1 // pred_region
      _
    $region25: #{tpu_custom_call.1} parent=1 // pred_fallthru
      _
    // Predicated region
    $region26: #{tpu_custom_call.1} parent=1 // pred_check
      _
    $region27: #{tpu_custom_call.1} parent=1 // pred_check_branch
      %26 = sbr.rel (0) target = $region29
    $region28: #{tpu_custom_call.1} parent=1 // pred_region
      _
    $region29: #{tpu_custom_call.1} parent=1 // pred_fallthru
      _
    %v28 = vld [vmem:[%s1] sm:$0xf]
    %v29 = vld [vmem:[%s1 + $0x4] sm:$0xf]
    %v30 = vld [vmem:[%s1 + $0x8] sm:$0xf]
    %v31 = vld [vmem:[%s1 + $0xc] sm:$0xf]
    %v32 = vld [vmem:[%s2] sm:$0xff]
    %v33 = vld [vmem:[%s2 + $0x8] sm:$0xff]
    %v34 = vld [vmem:[%s2 + $0x10] sm:$0xff]
    %v35 = vld [vmem:[%s2 + $0x18] sm:$0xff]
    %v36 = vld [vmem:[%s3] sm:$0xff]
    %v37 = vld [vmem:[%s3 + $0x8] sm:$0xff]
    %v38 = vld [vmem:[%s4] sm:$0xff]
    %v39 = vld [vmem:[%s4 + $0x8] sm:$0xff]
    %v40 = vld [vmem:[%s5] sm:$0xf]
    %v41 = vld [vmem:[%s6] sm:$0xf]
    %v42 = vld [vmem:[%s0] sm:$0xf]
    %v43 = vld [vmem:[%s0 + $0x4] sm:$0xf]
    %v44 = vld [vmem:[%s0 + $0x8] sm:$0xf]
    %v45 = vld [vmem:[%s0 + $0xc] sm:$0xf]
    %v46 = vld [vmem:[%s0 + $0x10] sm:$0xf]
    %v47 = vld [vmem:[%s0 + $0x14] sm:$0xf]
    %v48 = vld [vmem:[%s0 + $0x18] sm:$0xf]
    %v49 = vld [vmem:[%s0 + $0x1c] sm:$0xf]
    %v50 = vld [vmem:[%s0 + $0x20] sm:$0xf]
    %v51 = vld [vmem:[%s0 + $0x24] sm:$0xf]
    %v52 = vld [vmem:[%s0 + $0x28] sm:$0xf]
    %v53 = vld [vmem:[%s0 + $0x2c] sm:$0xf]
    %v54 = vld [vmem:[%s0 + $0x30] sm:$0xf]
    %v55 = vld [vmem:[%s0 + $0x34] sm:$0xf]
    %v56 = vld [vmem:[%s0 + $0x38] sm:$0xf]
    %v57 = vld [vmem:[%s0 + $0x3c] sm:$0xf]
    %59 = vset.pattern.permute.xlu0 0
    %60 = vperm.xlu0 %59, %v32
    %v61 = vpop.permute.xlu0 %60
    %64 = vset.pattern.permute.xlu0 0
    %65 = vperm.xlu0 %64, %v33
    %v66 = vpop.permute.xlu0 %65
    %69 = vset.pattern.permute.xlu0 0
    %70 = vperm.xlu0 %69, %v34
    %v71 = vpop.permute.xlu0 %70
    %74 = vset.pattern.permute.xlu0 0
    %75 = vperm.xlu0 %74, %v35
    %v76 = vpop.permute.xlu0 %75
    %v82 = vunpack.c.l.b16 %v28
    %v83 = vunpack.c.l.b16 %v29
    %v84 = vunpack.c.l.b16 %v30
    %v85 = vunpack.c.l.b16 %v31
    %v86 = vpack.c.b16 %v83, %v82
    %v87 = vpack.c.b16 %v85, %v84
    %v104 = vunpack.c.l.b16 %v42
    %v105 = vunpack.c.l.b16 %v43
    %v106 = vunpack.c.l.b16 %v44
    %v107 = vunpack.c.l.b16 %v45
    %v108 = vunpack.c.l.b16 %v46
    %v109 = vunpack.c.l.b16 %v47
    %v110 = vunpack.c.l.b16 %v48
    %v111 = vunpack.c.l.b16 %v49
    %v112 = vunpack.c.l.b16 %v50
    %v113 = vunpack.c.l.b16 %v51
    %v114 = vunpack.c.l.b16 %v52
    %v115 = vunpack.c.l.b16 %v53
    %v116 = vunpack.c.l.b16 %v54
    %v117 = vunpack.c.l.b16 %v55
    %v118 = vunpack.c.l.b16 %v56
    %v119 = vunpack.c.l.b16 %v57
    %v120 = vpack.c.b16 %v105, %v104
    %v121 = vpack.c.b16 %v107, %v106
    %v122 = vpack.c.b16 %v109, %v108
    %v123 = vpack.c.b16 %v111, %v110
    %v124 = vpack.c.b16 %v113, %v112
    %v125 = vpack.c.b16 %v115, %v114
    %v126 = vpack.c.b16 %v117, %v116
    %v127 = vpack.c.b16 %v119, %v118
    %vm128 = vcmask 162816
    %v130 = vsel %vm128, %v86, 0
    %v133 = vsel %vm128, %v87, 0
    %v136 = vsel %vm128, %v120, 0
    %v139 = vsel %vm128, %v121, 0
    %v142 = vsel %vm128, %v122, 0
    %v145 = vsel %vm128, %v123, 0
    %v148 = vsel %vm128, %v124, 0
    %v151 = vsel %vm128, %v125, 0
    %v154 = vsel %vm128, %v126, 0
    %v157 = vsel %vm128, %v127, 0
    %159 = vmatprep.subr.bf16.mxu0 0
    %160 = vmatpush1.bf16.xpose.msra.mxu0 %v157
    %161 = vmatprep.subr.bf16.mxu0 0
    %162 = vmatpush1.bf16.xpose.msra.mxu0 %v154
    %163 = vmatprep.subr.bf16.mxu0 0
    %164 = vmatpush1.bf16.xpose.msra.mxu0 %v151
    %165 = vmatprep.subr.bf16.mxu0 0
    %166 = vmatpush1.bf16.xpose.msra.mxu0 %v148
    %167 = vmatprep.subr.bf16.mxu0 0
    %168 = vmatpush1.bf16.xpose.msra.mxu0 %v145
    %169 = vmatprep.subr.bf16.mxu0 0
    %170 = vmatpush1.bf16.xpose.msra.mxu0 %v142
    %171 = vmatprep.subr.bf16.mxu0 0
    %172 = vmatpush1.bf16.xpose.msra.mxu0 %v139
    %173 = vmatprep.subr.bf16.mxu0 0
    %174 = vmatpush1.bf16.xpose.msra.mxu0 %v136
    %175 = vmatprep.subr.bf16.mxu0 0
    %176 = vmatpush2.bf16.xpose.msra.mxu0 0
    %177 = vmatprep.subr.bf16.mxu0 0
    %178 = vmatpush2.bf16.xpose.msra.mxu0 0
    %179 = vmatprep.subr.bf16.mxu0 0
    %180 = vmatpush2.bf16.xpose.msra.mxu0 0
    %181 = vmatprep.subr.bf16.mxu0 0
    %182 = vmatpush2.bf16.xpose.msra.mxu0 0
    %183 = vmatprep.subr.bf16.mxu0 0
    %184 = vmatpush2.bf16.xpose.msra.mxu0 0
    %185 = vmatprep.subr.bf16.mxu0 0
    %186 = vmatpush2.bf16.xpose.msra.mxu0 0
    %187 = vmatprep.subr.bf16.mxu0 0
    %188 = vmatpush2.bf16.xpose.msra.mxu0 0
    %189 = vmatprep.subr.bf16.mxu0 0
    %190 = vmatpush2.bf16.xpose.msra.mxu0 0
    %191 = vmatprep.mubr.bf16.mxu0 0
    %192 = vmatmul.mubr.bf16.gmra.mxu0 %v130
    %v193 = vpop.f32.mrf.mxu0
    %v194 = vadd.f32 %v61, %v193
    %v195 = vpop.f32.mrf.mxu0
    %v196 = vpop.f32.mrf.mxu0
    %v197 = vadd.f32 %v66, %v196
    %v198 = vpop.f32.mrf.mxu0
    %199 = vmatprep.mubr.bf16.mxu0 0
    %200 = vmatmul.mubr.bf16.gmra.mxu0 %v133
    %v201 = vpop.f32.mrf.mxu0
    %v202 = vadd.f32 %v71, %v201
    %v203 = vpop.f32.mrf.mxu0
    %v204 = vpop.f32.mrf.mxu0
    %v205 = vadd.f32 %v76, %v204
    %v206 = vpop.f32.mrf.mxu0
    %207 = vdwg.mxu0
    %v208 = vmax.f32 %v194, 0.0
    %v209 = vmax.f32 %v197, 0.0
    %v210 = vmax.f32 %v202, 0.0
    %v211 = vmax.f32 %v205, 0.0
    %213 = vset.pattern.permute.xlu0 0
    %214 = vperm.xlu0 %213, %v38
    %v215 = vpop.permute.xlu0 %214
    %218 = vset.pattern.permute.xlu0 0
    %219 = vperm.xlu0 %218, %v39
    %v220 = vpop.permute.xlu0 %219
    %vm222 = vcmask 261120
    %v224 = vsel %vm222, %v36, 0
    %v227 = vsel %vm222, %v37, 0
    %229 = vmatprep.subr.mxu0 0.0
    %230 = vmatpush1.msra.mxu0 0.0
    %231 = vmatprep.subr.mxu0 0.0
    %232 = vmatpush1.msra.mxu0 0.0
    %233 = vmatprep.subr.mxu0 0.0
    %234 = vmatpush1.msra.mxu0 0.0
    %235 = vmatprep.subr.mxu0 0.0
    %236 = vmatpush1.msra.mxu0 0.0
    %237 = vmatprep.subr.mxu0 0.0
    %238 = vmatpush1.msra.mxu0 0.0
    %239 = vmatprep.subr.mxu0 0.0
    %240 = vmatpush1.msra.mxu0 0.0
    %241 = vmatprep.subr.mxu0 0.0
    %242 = vmatpush1.msra.mxu0 0.0
    %243 = vmatprep.subr.mxu0 0.0
    %244 = vmatpush1.msra.mxu0 0.0
    %245 = vmatprep.subr.mxu0 0.0
    %246 = vmatpush1.msra.mxu0 0.0
    %247 = vmatprep.subr.mxu0 0.0
    %248 = vmatpush1.msra.mxu0 0.0
    %249 = vmatprep.subr.mxu0 0.0
    %250 = vmatpush1.msra.mxu0 0.0
    %251 = vmatprep.subr.mxu0 0.0
    %252 = vmatpush1.msra.mxu0 0.0
    %253 = vmatprep.subr.mxu0 0.0
    %254 = vmatpush1.msra.mxu0 %v211
    %255 = vmatprep.subr.mxu0 0.0
    %256 = vmatpush1.msra.mxu0 %v210
    %257 = vmatprep.subr.mxu0 0.0
    %258 = vmatpush1.msra.mxu0 %v209
    %259 = vmatprep.subr.mxu0 0.0
    %260 = vmatpush1.msra.mxu0 %v208
    %261 = vmatprep.subr.mxu0 0.0
    %262 = vmatpush2.msra.mxu0 0.0
    %263 = vmatprep.subr.mxu0 0.0
    %264 = vmatpush2.msra.mxu0 0.0
    %265 = vmatprep.subr.mxu0 0.0
    %266 = vmatpush2.msra.mxu0 0.0
    %267 = vmatprep.subr.mxu0 0.0
    %268 = vmatpush2.msra.mxu0 0.0
    %269 = vmatprep.subr.mxu0 0.0
    %270 = vmatpush2.msra.mxu0 0.0
    %271 = vmatprep.subr.mxu0 0.0
    %272 = vmatpush2.msra.mxu0 0.0
    %273 = vmatprep.subr.mxu0 0.0
    %274 = vmatpush2.msra.mxu0 0.0
    %275 = vmatprep.subr.mxu0 0.0
    %276 = vmatpush2.msra.mxu0 0.0
    %277 = vmatprep.subr.mxu0 0.0
    %278 = vmatpush2.msra.mxu0 0.0
    %279 = vmatprep.subr.mxu0 0.0
    %280 = vmatpush2.msra.mxu0 0.0
    %281 = vmatprep.subr.mxu0 0.0
    %282 = vmatpush2.msra.mxu0 0.0
    %283 = vmatprep.subr.mxu0 0.0
    %284 = vmatpush2.msra.mxu0 0.0
    %285 = vmatprep.subr.mxu0 0.0
    %286 = vmatpush2.msra.mxu0 0.0
    %287 = vmatprep.subr.mxu0 0.0
    %288 = vmatpush2.msra.mxu0 0.0
    %289 = vmatprep.subr.mxu0 0.0
    %290 = vmatpush2.msra.mxu0 0.0
    %291 = vmatprep.subr.mxu0 0.0
    %292 = vmatpush2.msra.mxu0 0.0
    %293 = vmatprep.mubr.f32.mxu0 0.0
    %294 = vmatmul.mubr.f32.gmra.mxu0 %v224
    %v295 = vpop.f32.mrf.mxu0
    %v296 = vadd.f32 %v215, %v295
    %v297 = vpop.f32.mrf.mxu0
    %298 = vmatprep.mubr.f32.mxu0 0.0
    %299 = vmatmul.mubr.f32.gmra.mxu0 %v227
    %v300 = vpop.f32.mrf.mxu0
    %v301 = vadd.f32 %v220, %v300
    %v302 = vpop.f32.mrf.mxu0
    %303 = vdwg.mxu0
    %v304 = vmax.f32 %v296, 0.0
    %v305 = vmax.f32 %v301, 0.0
    %307 = vset.pattern.permute.xlu0 0
    %308 = vperm.xlu0 %307, %v41
    %v309 = vpop.permute.xlu0 %308
    %vm311 = vcmask 130048
    %v313 = vsel %vm311, %v40, 0
    %315 = vmatprep.subr.mxu0 0.0
    %316 = vmatpush1.msra.mxu0 0.0
    %317 = vmatprep.subr.mxu0 0.0
    %318 = vmatpush1.msra.mxu0 0.0
    %319 = vmatprep.subr.mxu0 0.0
    %320 = vmatpush1.msra.mxu0 0.0
    %321 = vmatprep.subr.mxu0 0.0
    %322 = vmatpush1.msra.mxu0 0.0
    %323 = vmatprep.subr.mxu0 0.0
    %324 = vmatpush1.msra.mxu0 0.0
    %325 = vmatprep.subr.mxu0 0.0
    %326 = vmatpush1.msra.mxu0 0.0
    %327 = vmatprep.subr.mxu0 0.0
    %328 = vmatpush1.msra.mxu0 0.0
    %329 = vmatprep.subr.mxu0 0.0
    %330 = vmatpush1.msra.mxu0 0.0
    %331 = vmatprep.subr.mxu0 0.0
    %332 = vmatpush1.msra.mxu0 0.0
    %333 = vmatprep.subr.mxu0 0.0
    %334 = vmatpush1.msra.mxu0 0.0
    %335 = vmatprep.subr.mxu0 0.0
    %336 = vmatpush1.msra.mxu0 0.0
    %337 = vmatprep.subr.mxu0 0.0
    %338 = vmatpush1.msra.mxu0 0.0
    %339 = vmatprep.subr.mxu0 0.0
    %340 = vmatpush1.msra.mxu0 0.0
    %341 = vmatprep.subr.mxu0 0.0
    %342 = vmatpush1.msra.mxu0 0.0
    %343 = vmatprep.subr.mxu0 0.0
    %344 = vmatpush1.msra.mxu0 %v305
    %345 = vmatprep.subr.mxu0 0.0
    %346 = vmatpush1.msra.mxu0 %v304
    %347 = vmatprep.subr.mxu0 0.0
    %348 = vmatpush2.msra.mxu0 0.0
    %349 = vmatprep.subr.mxu0 0.0
    %350 = vmatpush2.msra.mxu0 0.0
    %351 = vmatprep.subr.mxu0 0.0
    %352 = vmatpush2.msra.mxu0 0.0
    %353 = vmatprep.subr.mxu0 0.0
    %354 = vmatpush2.msra.mxu0 0.0
    %355 = vmatprep.subr.mxu0 0.0
    %356 = vmatpush2.msra.mxu0 0.0
    %357 = vmatprep.subr.mxu0 0.0
    %358 = vmatpush2.msra.mxu0 0.0
    %359 = vmatprep.subr.mxu0 0.0
    %360 = vmatpush2.msra.mxu0 0.0
    %361 = vmatprep.subr.mxu0 0.0
    %362 = vmatpush2.msra.mxu0 0.0
    %363 = vmatprep.subr.mxu0 0.0
    %364 = vmatpush2.msra.mxu0 0.0
    %365 = vmatprep.subr.mxu0 0.0
    %366 = vmatpush2.msra.mxu0 0.0
    %367 = vmatprep.subr.mxu0 0.0
    %368 = vmatpush2.msra.mxu0 0.0
    %369 = vmatprep.subr.mxu0 0.0
    %370 = vmatpush2.msra.mxu0 0.0
    %371 = vmatprep.subr.mxu0 0.0
    %372 = vmatpush2.msra.mxu0 0.0
    %373 = vmatprep.subr.mxu0 0.0
    %374 = vmatpush2.msra.mxu0 0.0
    %375 = vmatprep.subr.mxu0 0.0
    %376 = vmatpush2.msra.mxu0 0.0
    %377 = vmatprep.subr.mxu0 0.0
    %378 = vmatpush2.msra.mxu0 0.0
    %379 = vmatprep.mubr.f32.mxu0 0.0
    %380 = vmatmul.mubr.f32.gmra.mxu0 %v313
    %v381 = vpop.f32.mrf.mxu0
    %v382 = vadd.f32 %v309, %v381
    %v383 = vpop.f32.mrf.mxu0
    %384 = vdwg.mxu0
    %v385 = vmul.f32 %v382, 0.5
    %v386 = vtanh.pop %v385
    %v387 = vadd.f32 %v386, 1.0
    %v388 = vmul.f32 %v387, 0.5
    %v390 = vrot.slane %v382, 1
    %v392 = vmax.f32 %v382, %v390
    %v394 = vrot.slane %v392, 1
    %v396 = vmax.f32 %v382, %v394
    %v397 = vlaneseq
    %v398 = vshrl.u32 %v397, 7
    %v399 = vsub.s32 1, %v398
    %v400 = vrot.slane %v396, %v399
    %v401 = vsub.f32 %v382, %v400
    %v402 = vmul.f32 %v401, 1.442695
    %v403 = vpow.pop %v402
    %v405 = vrot.slane %v403, 1
    %v407 = vadd.f32 %v403, %v405
    %v408 = vrot.slane %v403, 2
    %v410 = vadd.f32 %v407, %v408
    %v411 = vrcp.pop %v410
    %v412 = vmul.f32 1.0, %v411
    %413 = vst [vmem:[#allocation2] sm:$0x1] %v388
    %v414 = vlaneseq
    %v415 = vshrl.u32 %v414, 7
    %v416 = vsub.s32 1, %v415
    %v417 = vrot.slane %v412, %v416
    %v418 = vmul.f32 %v403, %v417
    %419 = vst [vmem:[#allocation2] sm:$0xe] %v418
    // Predicated region
    $region30: #{tpu_custom_call.1} parent=1 // pred_check
      _
    $region31: #{tpu_custom_call.1} parent=1 // pred_check_branch
      %421 = sbr.rel (0) target = $region33
    $region32: #{tpu_custom_call.1} parent=1 // pred_region
      %s423 = ssub.s32 64, 64
      %424 = vsyncadd [#allocation3], %s423
      %s426 = sshll.u32 [#allocation2], 4
      %s427 = int_to_ptr.vmem [resolvable:$true] %s426
      %429 = dma.vmem_to_hbm [thread:$0]  %s427, 64, %s7, [#allocation3]
    $region33: #{tpu_custom_call.1} parent=1 // pred_fallthru
      _
    // Predicated region
    $region34: #{tpu_custom_call.1} parent=1 // pred_check
      _
    $region35: #{tpu_custom_call.1} parent=1 // pred_check_branch
      %431 = sbr.rel (0) target = $region37
    $region36: #{tpu_custom_call.1} parent=1 // pred_region
      %432 = dma.done [#allocation3], 64
    $region37: #{tpu_custom_call.1} parent=1 // pred_fallthru
      _
    %433 = vsyncpa [#allocation3], 1

</llo_original>
